<compile_context>
chip_gen: v6e
topology: v6e:2x2x1
jax: 0.10.0
libtpu: 0.0.40
codegen_flags: <defaults>
</compile_context>

<pallas_src>
import math

import jax
import jax.numpy as jnp
from jax.experimental import pallas as pl
from jax.experimental.pallas import tpu as pltpu

_EPS_SQ = 1e-24   # (F.normalize eps = 1e-12) ** 2, applied to the squared norm
_LANE = 128
_SUBLANE = 8


def _round_up(x, m):
    return (x + m - 1) // m * m


def _chip_caps():
    """(physical VMEM bytes, is_v5e). Best-effort; safe fallbacks."""
    try:
        cap = int(pltpu.get_tpu_info().vmem_capacity_bytes)
    except Exception:
        cap = 64 * 1024 * 1024  # conservative (v7x per-TensorCore VMEM)
    kind = ""
    try:
        kind = jax.devices()[0].device_kind.lower()
    except Exception:
        pass
    is_v5e = ("v5e" in kind) or ("v5 lite" in kind) or ("v5litepod" in kind)
    return cap, is_v5e


def _vmem_limit_bytes(cap):
    # ~3/4 of physical VMEM; leave headroom for compiler-internal scratch.
    return int(min((cap * 3) // 4, 100 * 1024 * 1024))


def _plan_tn(d, k, w_itemsize, out_features):
    """Pick the class-tile width TN at weight-prep time.

    Budgets 3 weight buffers (Buffered(3)), plus double-buffered f32 feature
    and output tiles at the per-generation target batch tile.
    """
    cap, is_v5e = _chip_caps()
    vmem_limit = _vmem_limit_bytes(cap)
    tb_target = 512 if is_v5e else 1024
    tn_gen_cap = 2048 if is_v5e else 8192
    tn_cap = min(max(_round_up(out_features, _LANE), _LANE), tn_gen_cap)

    def fits(tn):
        w_bytes = 3 * k * d * tn * w_itemsize            # up to 3 weight buffers
        x_bytes = 2 * tb_target * d * 4                  # f32 feature double-buffer
        o_bytes = 2 * tb_target * tn * 4                 # f32 output double-buffer
        return w_bytes + x_bytes + o_bytes <= vmem_limit

    tn = _LANE
    while tn * 2 <= tn_cap and fits(tn * 2):
        tn *= 2
    return min(tn, tn_cap)


def _pick_tb(b, d, tn, k, w_itemsize, out_itemsize, n_tiles):
    """Pick the batch tile at forward time so everything fits the VMEM budget."""
    cap, is_v5e = _chip_caps()
    vmem_limit = _vmem_limit_bytes(cap)
    tb_cap = 512 if is_v5e else 1024

    w_bufs = 3 if n_tiles > 1 else 2
    w_bytes = w_bufs * k * d * tn * w_itemsize
    per_row = 2 * d * 4 + 2 * tn * out_itemsize          # x (f32) + out double-buffers
    budget = vmem_limit - w_bytes

    if budget >= per_row * _SUBLANE:
        tb_fit = (budget // per_row // _SUBLANE) * _SUBLANE
    else:
        tb_fit = _SUBLANE                                 # pathological: see TODO above
    tb = max(_SUBLANE, min(tb_cap, tb_fit, _round_up(b, _SUBLANE)))

    needed = w_bytes + tb * per_row
    vmem_limit = max(vmem_limit, min(needed + (2 << 20), cap))
    return tb, w_bufs, vmem_limit


def prepare_arc_weight(weight, out_features, k, compute_dtype=jnp.bfloat16, tn=None):
    """Hoisted per-weight-update preprocessing (do NOT redo every forward).

    weight: (out_features * k, D)  ->  (n_tiles, k, D, TN), L2-normalized rows,
    contiguous per-(k, D, TN) tile so each weight-tile DMA is one contiguous read.
    """
    n_times_k, d = weight.shape
    assert n_times_k == out_features * k
    w_itemsize = jnp.dtype(compute_dtype).itemsize
    if tn is None:
        tn = _plan_tn(d, k, w_itemsize, out_features)
    n_pad = _round_up(out_features, tn)
    n_tiles = n_pad // tn

    w = weight.astype(jnp.float32)
    w = w * jax.lax.rsqrt(jnp.maximum(jnp.sum(w * w, axis=-1, keepdims=True), _EPS_SQ))
    # Row j*k + c is class j, sub-center c (matches torch .view(-1, N, k)).
    w = w.reshape(out_features, k, d).transpose(1, 2, 0)          # (k, D, N)
    if n_pad > out_features:
        w = jnp.pad(w, ((0, 0), (0, 0), (0, n_pad - out_features)))
    w = w.reshape(k, d, n_tiles, tn).transpose(2, 0, 1, 3)        # (n_tiles, k, D, TN)
    return w.astype(compute_dtype)


def _arc_subcenter_kernel(x_ref, w_ref, o_ref):
    # x_ref: (TB, D)     f32 feature tile
    # w_ref: (k, D, TN)  pre-normalized weight tile (compute dtype, lane axis on N)
    # o_ref: (TB, TN)    max-over-sub-center cosines
    x = x_ref[...].astype(jnp.float32)
    inv_norm = jax.lax.rsqrt(
        jnp.maximum(jnp.sum(x * x, axis=-1, keepdims=True), _EPS_SQ))   # EUP rsqrt
    x_n = (x * inv_norm).astype(w_ref.dtype)   # bf16 (or f32) operands for the MXU

    k = w_ref.shape[0]  # small & static -> unrolled
    acc = jnp.dot(x_n, w_ref[0], preferred_element_type=jnp.float32)
    for c in range(1, k):
        acc = jnp.maximum(
            acc, jnp.dot(x_n, w_ref[c], preferred_element_type=jnp.float32))
    o_ref[...] = acc.astype(o_ref.dtype)


def arc_margin_product_subcenter_fwd(features, w_prepped, out_features,
                                     out_dtype=jnp.float32):
    """features: (B, D) f32; w_prepped: (n_tiles, k, D, TN) from prepare_arc_weight.

    out_dtype=jnp.bfloat16 halves the cosine writeback traffic for large B*N.
    """
    b, d = features.shape
    n_tiles, k, d_w, tn = w_prepped.shape
    assert d_w == d
    n_pad = n_tiles * tn
    assert n_pad >= out_features

    w_itemsize = jnp.dtype(w_prepped.dtype).itemsize
    out_itemsize = jnp.dtype(out_dtype).itemsize
    tb, w_bufs, vmem_limit = _pick_tb(b, d, tn, k, w_itemsize, out_itemsize, n_tiles)
    b_pad = _round_up(b, tb)

    x = features.astype(jnp.float32)
    if b_pad > b:
        x = jnp.pad(x, ((0, b_pad - b), (0, 0)))

    # Weight tile: constant block index across the inner (batch) loop -> its DMA
    # is skipped on revisit; Buffered(3) starts the next tile's DMA two inner
    # steps before each N-tile boundary.
    w_block = (pl.Squeezed(), k, d, tn)
    w_index = lambda j, i: (j, 0, 0, 0)
    if w_bufs > 2:
        w_spec = pl.BlockSpec(w_block, w_index, pipeline_mode=pl.Buffered(w_bufs))
    else:
        w_spec = pl.BlockSpec(w_block, w_index)

    # Grid: N-tiles outermost, batch-tiles innermost (weight streamed once total).
    grid = (n_tiles, b_pad // tb)
    out = pl.pallas_call(
        _arc_subcenter_kernel,
        out_shape=jax.ShapeDtypeStruct((b_pad, n_pad), out_dtype),
        grid_spec=pltpu.PrefetchScalarGridSpec(
            num_scalar_prefetch=0,
            grid=grid,
            in_specs=[
                pl.BlockSpec((tb, d), lambda j, i: (i, 0)),
                w_spec,
            ],
            out_specs=pl.BlockSpec((tb, tn), lambda j, i: (i, j)),
        ),
        compiler_params=pltpu.CompilerParams(
            dimension_semantics=("parallel", "parallel"),
            vmem_limit_bytes=vmem_limit,
        ),
    )(x, w_prepped)
    return out[:b, :out_features]


def arc_margin_product_subcenter(features, weight, out_features, k,
                                 compute_dtype=jnp.bfloat16,
                                 out_dtype=jnp.float32):
    """One-shot convenience (prep + kernel). For repeated forwards with a fixed
    weight, call prepare_arc_weight() once and arc_margin_product_subcenter_fwd()
    per step to keep the weight prep off the per-call path."""
    w_prepped = prepare_arc_weight(weight, out_features, k, compute_dtype)
    return arc_margin_product_subcenter_fwd(features, w_prepped, out_features,
                                            out_dtype=out_dtype)


def _reference(features, weight, out_features, k):
    eps = 1e-12
    xn = features / jnp.maximum(
        jnp.linalg.norm(features, axis=-1, keepdims=True), eps)
    wn = weight / jnp.maximum(
        jnp.linalg.norm(weight, axis=-1, keepdims=True), eps)
    cos_all = (xn @ wn.T).reshape(-1, out_features, k)
    return cos_all.max(axis=2)


if __name__ == "__main__":
    key = jax.random.PRNGKey(0)
    k_feat, k_w = jax.random.split(key)

    B = 8
    in_features = 32
    out_features = 16
    k = 3

    # Deterministic "module init": uniform(-stdv, stdv), stdv = 1/sqrt(in_features)
    stdv = 1.0 / math.sqrt(in_features)
    weight = jax.random.uniform(
        k_w, (out_features * k, in_features),
        minval=-stdv, maxval=stdv, dtype=jnp.float32)
    features = jax.random.normal(k_feat, (B, in_features), dtype=jnp.float32)

    ref = _reference(features, weight, out_features, k)

    # f32 compute path: tight check against the reference.
    w_f32 = prepare_arc_weight(weight, out_features, k, compute_dtype=jnp.float32)
    out_f32 = jax.block_until_ready(
        arc_margin_product_subcenter_fwd(features, w_f32, out_features))
    assert out_f32.shape == (B, out_features)
    assert jnp.allclose(out_f32, ref, atol=1e-5, rtol=1e-5)

    # bf16 MXU path (default fast path): looser tolerance from bf16 operands.
    w_bf16 = prepare_arc_weight(weight, out_features, k, compute_dtype=jnp.bfloat16)
    out_bf16 = jax.block_until_ready(
        arc_margin_product_subcenter_fwd(features, w_bf16, out_features))
    assert out_bf16.shape == (B, out_features)
    assert jnp.allclose(out_bf16, ref, atol=2.5e-2, rtol=2.5e-2)

    # Optional bf16 output writeback (halves cosine HBM traffic for huge B*N).
    out_bf16_o = jax.block_until_ready(
        arc_margin_product_subcenter_fwd(features, w_bf16, out_features,
                                         out_dtype=jnp.bfloat16))
    assert out_bf16_o.shape == (B, out_features)
    assert jnp.allclose(out_bf16_o.astype(jnp.float32), ref, atol=4e-2, rtol=4e-2)

    print("KERNEL_OK")
</pallas_src>

<mosaic_0001>
module attributes {stable_mosaic.version = 11 : i64} {
  func.func @_arc_subcenter_kernel(%arg0: i32, %arg1: i32, %arg2: memref<8x32xf32, #tpu.memory_space<vmem>>, %arg3: memref<1x3x32x128xf32, #tpu.memory_space<vmem>>, %arg4: memref<8x128xf32, #tpu.memory_space<vmem>>) attributes {dimension_semantics = [#tpu.dimension_semantics<parallel>, #tpu.dimension_semantics<parallel>], iteration_bounds = array<i64: 1, 1>, scalar_prefetch = 0 : i64, scratch_operands = 0 : i64, tpu.core_type = #tpu.core_type<tc>, window_params = [{transform_indices = @transform_0, window_bounds = array<i64: 8, 32>}, {transform_indices = @transform_1, window_bounds = array<i64: 1, 3, 32, 128>}, {transform_indices = @transform_2, window_bounds = array<i64: 8, 128>}]} {
    %c0 = arith.constant 0 : index
    %c0_0 = arith.constant 0 : index
    %0 = vector.load %arg2[%c0, %c0_0] : memref<8x32xf32, #tpu.memory_space<vmem>>, vector<8x32xf32>
    %1 = arith.mulf %0, %0 : vector<8x32xf32>
    %cst = arith.constant dense<0.000000e+00> : vector<8xf32>
    %2 = vector.multi_reduction <add>, %1, %cst [1] : vector<8x32xf32> to vector<8xf32>
    %3 = vector.shape_cast %2 : vector<8xf32> to vector<8x1xf32>
    %cst_1 = arith.constant 1.000000e-24 : f32
    %4 = vector.broadcast %cst_1 : f32 to vector<8x1xf32>
    %5 = arith.maximumf %3, %4 : vector<8x1xf32>
    %6 = math.rsqrt %5 : vector<8x1xf32>
    %7 = vector.broadcast %6 : vector<8x1xf32> to vector<8x32xf32>
    %8 = arith.mulf %0, %7 : vector<8x32xf32>
    %c0_2 = arith.constant 0 : index
    %c0_3 = arith.constant 0 : index
    %c0_4 = arith.constant 0 : index
    %c0_5 = arith.constant 0 : index
    %9 = vector.load %arg3[%c0_2, %c0_3, %c0_4, %c0_5] : memref<1x3x32x128xf32, #tpu.memory_space<vmem>>, vector<1x1x32x128xf32>
    %10 = vector.shape_cast %9 : vector<1x1x32x128xf32> to vector<32x128xf32>
    %cst_6 = arith.constant dense<0.000000e+00> : vector<8x128xf32>
    %11 = tpu.matmul %8, %10, %cst_6 {dimension_numbers = #tpu.dot_dimension_numbers<[1], [0], [0], [1], [0, 0, 1, 1], [], []>} : vector<8x32xf32>, vector<32x128xf32>, vector<8x128xf32> -> vector<8x128xf32>
    %c0_7 = arith.constant 0 : index
    %c1 = arith.constant 1 : index
    %c0_8 = arith.constant 0 : index
    %c0_9 = arith.constant 0 : index
    %12 = vector.load %arg3[%c0_7, %c1, %c0_8, %c0_9] : memref<1x3x32x128xf32, #tpu.memory_space<vmem>>, vector<1x1x32x128xf32>
    %13 = vector.shape_cast %12 : vector<1x1x32x128xf32> to vector<32x128xf32>
    %cst_10 = arith.constant dense<0.000000e+00> : vector<8x128xf32>
    %14 = tpu.matmul %8, %13, %cst_10 {dimension_numbers = #tpu.dot_dimension_numbers<[1], [0], [0], [1], [0, 0, 1, 1], [], []>} : vector<8x32xf32>, vector<32x128xf32>, vector<8x128xf32> -> vector<8x128xf32>
    %15 = arith.maximumf %11, %14 : vector<8x128xf32>
    %c0_11 = arith.constant 0 : index
    %c2 = arith.constant 2 : index
    %c0_12 = arith.constant 0 : index
    %c0_13 = arith.constant 0 : index
    %16 = vector.load %arg3[%c0_11, %c2, %c0_12, %c0_13] : memref<1x3x32x128xf32, #tpu.memory_space<vmem>>, vector<1x1x32x128xf32>
    %17 = vector.shape_cast %16 : vector<1x1x32x128xf32> to vector<32x128xf32>
    %cst_14 = arith.constant dense<0.000000e+00> : vector<8x128xf32>
    %18 = tpu.matmul %8, %17, %cst_14 {dimension_numbers = #tpu.dot_dimension_numbers<[1], [0], [0], [1], [0, 0, 1, 1], [], []>} : vector<8x32xf32>, vector<32x128xf32>, vector<8x128xf32> -> vector<8x128xf32>
    %19 = arith.maximumf %15, %18 : vector<8x128xf32>
    %c0_15 = arith.constant 0 : index
    %c0_16 = arith.constant 0 : index
    %20 = vector.load %arg4[%c0_15, %c0_16] : memref<8x128xf32, #tpu.memory_space<vmem>>, vector<8x128xf32>
    tpu.vector_store %arg4[%c0_15, %c0_16], %19 {strides = array<i32>} : memref<8x128xf32, #tpu.memory_space<vmem>>, vector<8x128xf32>,
    return
  }
  func.func @transform_0(%arg0: i32, %arg1: i32) -> (i32, i32) {
    %c0_i32 = arith.constant 0 : i32
    %c0_i32_0 = arith.constant 0 : i32
    return %arg1, %c0_i32 : i32, i32
  }
  func.func @transform_1(%arg0: i32, %arg1: i32) -> (i32, i32, i32, i32) {
    %c0_i32 = arith.constant 0 : i32
    %c0_i32_0 = arith.constant 0 : i32
    %c0_i32_1 = arith.constant 0 : i32
    %c0_i32_2 = arith.constant 0 : i32
    return %arg0, %c0_i32, %c0_i32_0, %c0_i32_1 : i32, i32, i32, i32
  }
  func.func @transform_2(%arg0: i32, %arg1: i32) -> (i32, i32) {
    %c0_i32 = arith.constant 0 : i32
    return %arg1, %arg0 : i32, i32
  }
}

</mosaic_0001>

<llo_original>
// kernel: tpu_custom_call.1
$region0: #{tpu_custom_call.1}
  #allocation0 [shape = 'u32[]', space=smem, size = 0x4, offset = 0x4, fixed_abs, tag = 'smem constant byte address 0x4 - core index']
  #allocation1 [shape = 'u32[144,128]{1,0:T(1,128)}', space=vmem, size = 0x12000, scoped, tag = 'internal scratch']
  %s0 = inlined_call_operand.hbm [shape: f32[8,32], index: 0, kind: input, shape index: {}]
  %s1 = inlined_call_operand.hbm [shape: f32[1,3,32,128], index: 1, kind: input, shape index: {}]
  %s2 = inlined_call_operand.hbm [shape: f32[8,128], index: 2, kind: output, shape index: {}]
  %s3 = sld [smem:[#allocation0]]
  $region26: #{tpu_custom_call.1} parent=0
    _
  %s5 = ssub.s32 1, %s3
  %s6 = scalar_select 0, %s5, %s3
  $region1: #{tpu_custom_call.1} parent=0
    #allocation2 [shape = 'u8[4096]{0}', space=vmem, size = 0x1000, scoped, tag = 'input window, operand 0, single buffered']
    #allocation3 [shape = 's32[1]{0}', space=sflag, size = 0x4, scoped, tag = 'scoped memory for tpu_custom_call.1']
    #allocation4 [shape = 's32[1]{0}', space=sflag, size = 0x4, scoped, tag = 'scoped memory for tpu_custom_call.1']
    #allocation5 [shape = 'u8[49152]{0}', space=vmem, size = 0xc000, scoped, tag = 'input window, operand 1, single buffered']
    #allocation6 [shape = 's32[1]{0}', space=sflag, size = 0x4, scoped, tag = 'scoped memory for tpu_custom_call.1']
    #allocation7 [shape = 'u8[4096]{0}', space=vmem, size = 0x1000, scoped, tag = 'output window, operand 0, single buffered']
    %7 = vsyncpa [#allocation3], 0
    %8 = vsyncpa [#allocation6], 0
    %9 = vsyncpa [#allocation4], 0
    // Predicated region
    $region2: #{tpu_custom_call.1} parent=1 // pred_check
      _
    $region3: #{tpu_custom_call.1} parent=1 // pred_check_branch
      %11 = sbr.rel (0) target = $region5
    $region4: #{tpu_custom_call.1} parent=1 // pred_region
      %s13 = ssub.s32 128, 128
      %14 = vsyncadd [#allocation3], %s13
      %s16 = sshll.u32 [#allocation2], 4
      %s17 = int_to_ptr.vmem [resolvable:$true] %s16
      %19 = dma.hbm_to_vmem [thread:$0]  %s0, 128, %s17, [#allocation3]
    $region5: #{tpu_custom_call.1} parent=1 // pred_fallthru
      _
    // Predicated region
    $region6: #{tpu_custom_call.1} parent=1 // pred_check
      _
    $region7: #{tpu_custom_call.1} parent=1 // pred_check_branch
      %21 = sbr.rel (0) target = $region9
    $region8: #{tpu_custom_call.1} parent=1 // pred_region
      %s23 = ssub.s32 1536, 1536
      %24 = vsyncadd [#allocation6], %s23
      %s25 = sshll.u32 [#allocation5], 4
      %s26 = int_to_ptr.vmem [resolvable:$true] %s25
      %31 = dma.hbm_to_vmem [thread:$0]  %s1, 1536, %s26, [#allocation6], 128, 128, 8
    $region9: #{tpu_custom_call.1} parent=1 // pred_fallthru
      _
    // Predicated region
    $region10: #{tpu_custom_call.1} parent=1 // pred_check
      _
    $region11: #{tpu_custom_call.1} parent=1 // pred_check_branch
      %33 = sbr.rel (0) target = $region13
    $region12: #{tpu_custom_call.1} parent=1 // pred_region
      %34 = dma.done [#allocation3], 128
    $region13: #{tpu_custom_call.1} parent=1 // pred_fallthru
      _
    // Predicated region
    $region14: #{tpu_custom_call.1} parent=1 // pred_check
      _
    $region15: #{tpu_custom_call.1} parent=1 // pred_check_branch
      %36 = sbr.rel (0) target = $region17
    $region16: #{tpu_custom_call.1} parent=1 // pred_region
      %37 = dma.done [#allocation6], 1536
    $region17: #{tpu_custom_call.1} parent=1 // pred_fallthru
      _
    %v38 = vld [vmem:[#allocation2] sm:$0xff]
    %v39 = vmul.f32 %v38, %v38
    %vm40 = vcmask 261120
    %v41 = vsel %vm40, %v39, 0.0
    %42 = vadd.xlane.f32.xlu0 %v41
    %v43 = vpop.xlane.xlu0 %42
    %v44 = vmax.f32 %v43, 1e-24
    %v45 = vrsqrt.pop %v44
    %v46 = vmul.f32 %v38, %v45
    %v47 = vld [vmem:[#allocation5] sm:$0xff]
    %v48 = vld [vmem:[#allocation5 + $0x8] sm:$0xff]
    %v49 = vld [vmem:[#allocation5 + $0x10] sm:$0xff]
    %v50 = vld [vmem:[#allocation5 + $0x18] sm:$0xff]
    %v52 = vsel %vm40, %v46, 0
    %54 = vmatprep.subr.mxu0 0.0
    %55 = vmatpush1.msra.mxu0 0.0
    %56 = vmatprep.subr.mxu0 0.0
    %57 = vmatpush1.msra.mxu0 0.0
    %58 = vmatprep.subr.mxu0 0.0
    %59 = vmatpush1.msra.mxu0 0.0
    %60 = vmatprep.subr.mxu0 0.0
    %61 = vmatpush1.msra.mxu0 0.0
    %62 = vmatprep.subr.mxu0 0.0
    %63 = vmatpush1.msra.mxu0 0.0
    %64 = vmatprep.subr.mxu0 0.0
    %65 = vmatpush1.msra.mxu0 0.0
    %66 = vmatprep.subr.mxu0 0.0
    %67 = vmatpush1.msra.mxu0 0.0
    %68 = vmatprep.subr.mxu0 0.0
    %69 = vmatpush1.msra.mxu0 0.0
    %70 = vmatprep.subr.mxu0 0.0
    %71 = vmatpush1.msra.mxu0 0.0
    %72 = vmatprep.subr.mxu0 0.0
    %73 = vmatpush1.msra.mxu0 0.0
    %74 = vmatprep.subr.mxu0 0.0
    %75 = vmatpush1.msra.mxu0 0.0
    %76 = vmatprep.subr.mxu0 0.0
    %77 = vmatpush1.msra.mxu0 0.0
    %78 = vmatprep.subr.mxu0 0.0
    %79 = vmatpush1.msra.mxu0 %v50
    %80 = vmatprep.subr.mxu0 0.0
    %81 = vmatpush1.msra.mxu0 %v49
    %82 = vmatprep.subr.mxu0 0.0
    %83 = vmatpush1.msra.mxu0 %v48
    %84 = vmatprep.subr.mxu0 0.0
    %85 = vmatpush1.msra.mxu0 %v47
    %86 = vmatprep.subr.mxu0 0.0
    %87 = vmatpush2.msra.mxu0 0.0
    %88 = vmatprep.subr.mxu0 0.0
    %89 = vmatpush2.msra.mxu0 0.0
    %90 = vmatprep.subr.mxu0 0.0
    %91 = vmatpush2.msra.mxu0 0.0
    %92 = vmatprep.subr.mxu0 0.0
    %93 = vmatpush2.msra.mxu0 0.0
    %94 = vmatprep.subr.mxu0 0.0
    %95 = vmatpush2.msra.mxu0 0.0
    %96 = vmatprep.subr.mxu0 0.0
    %97 = vmatpush2.msra.mxu0 0.0
    %98 = vmatprep.subr.mxu0 0.0
    %99 = vmatpush2.msra.mxu0 0.0
    %100 = vmatprep.subr.mxu0 0.0
    %101 = vmatpush2.msra.mxu0 0.0
    %102 = vmatprep.subr.mxu0 0.0
    %103 = vmatpush2.msra.mxu0 0.0
    %104 = vmatprep.subr.mxu0 0.0
    %105 = vmatpush2.msra.mxu0 0.0
    %106 = vmatprep.subr.mxu0 0.0
    %107 = vmatpush2.msra.mxu0 0.0
    %108 = vmatprep.subr.mxu0 0.0
    %109 = vmatpush2.msra.mxu0 0.0
    %110 = vmatprep.subr.mxu0 0.0
    %111 = vmatpush2.msra.mxu0 0.0
    %112 = vmatprep.subr.mxu0 0.0
    %113 = vmatpush2.msra.mxu0 0.0
    %114 = vmatprep.subr.mxu0 0.0
    %115 = vmatpush2.msra.mxu0 0.0
    %116 = vmatprep.subr.mxu0 0.0
    %117 = vmatpush2.msra.mxu0 0.0
    %118 = vmatprep.mubr.f32.mxu0 0.0
    %119 = vmatmul.mubr.f32.gmra.mxu0 %v52
    %v120 = vpop.f32.mrf.mxu0
    %v121 = vadd.f32 0.0, %v120
    %v122 = vpop.f32.mrf.mxu0
    %123 = vdwg.mxu0
    %s124 = scalar_lea.vmem [#allocation5], 32
    %v125 = vld [vmem:[%s124] sm:$0xff]
    %v126 = vld [vmem:[%s124 + $0x8] sm:$0xff]
    %v127 = vld [vmem:[%s124 + $0x10] sm:$0xff]
    %v128 = vld [vmem:[%s124 + $0x18] sm:$0xff]
    %129 = vmatprep.subr.mxu0 0.0
    %130 = vmatpush1.msra.mxu0 0.0
    %131 = vmatprep.subr.mxu0 0.0
    %132 = vmatpush1.msra.mxu0 0.0
    %133 = vmatprep.subr.mxu0 0.0
    %134 = vmatpush1.msra.mxu0 0.0
    %135 = vmatprep.subr.mxu0 0.0
    %136 = vmatpush1.msra.mxu0 0.0
    %137 = vmatprep.subr.mxu0 0.0
    %138 = vmatpush1.msra.mxu0 0.0
    %139 = vmatprep.subr.mxu0 0.0
    %140 = vmatpush1.msra.mxu0 0.0
    %141 = vmatprep.subr.mxu0 0.0
    %142 = vmatpush1.msra.mxu0 0.0
    %143 = vmatprep.subr.mxu0 0.0
    %144 = vmatpush1.msra.mxu0 0.0
    %145 = vmatprep.subr.mxu0 0.0
    %146 = vmatpush1.msra.mxu0 0.0
    %147 = vmatprep.subr.mxu0 0.0
    %148 = vmatpush1.msra.mxu0 0.0
    %149 = vmatprep.subr.mxu0 0.0
    %150 = vmatpush1.msra.mxu0 0.0
    %151 = vmatprep.subr.mxu0 0.0
    %152 = vmatpush1.msra.mxu0 0.0
    %153 = vmatprep.subr.mxu0 0.0
    %154 = vmatpush1.msra.mxu0 %v128
    %155 = vmatprep.subr.mxu0 0.0
    %156 = vmatpush1.msra.mxu0 %v127
    %157 = vmatprep.subr.mxu0 0.0
    %158 = vmatpush1.msra.mxu0 %v126
    %159 = vmatprep.subr.mxu0 0.0
    %160 = vmatpush1.msra.mxu0 %v125
    %161 = vmatprep.subr.mxu0 0.0
    %162 = vmatpush2.msra.mxu0 0.0
    %163 = vmatprep.subr.mxu0 0.0
    %164 = vmatpush2.msra.mxu0 0.0
    %165 = vmatprep.subr.mxu0 0.0
    %166 = vmatpush2.msra.mxu0 0.0
    %167 = vmatprep.subr.mxu0 0.0
    %168 = vmatpush2.msra.mxu0 0.0
    %169 = vmatprep.subr.mxu0 0.0
    %170 = vmatpush2.msra.mxu0 0.0
    %171 = vmatprep.subr.mxu0 0.0
    %172 = vmatpush2.msra.mxu0 0.0
    %173 = vmatprep.subr.mxu0 0.0
    %174 = vmatpush2.msra.mxu0 0.0
    %175 = vmatprep.subr.mxu0 0.0
    %176 = vmatpush2.msra.mxu0 0.0
    %177 = vmatprep.subr.mxu0 0.0
    %178 = vmatpush2.msra.mxu0 0.0
    %179 = vmatprep.subr.mxu0 0.0
    %180 = vmatpush2.msra.mxu0 0.0
    %181 = vmatprep.subr.mxu0 0.0
    %182 = vmatpush2.msra.mxu0 0.0
    %183 = vmatprep.subr.mxu0 0.0
    %184 = vmatpush2.msra.mxu0 0.0
    %185 = vmatprep.subr.mxu0 0.0
    %186 = vmatpush2.msra.mxu0 0.0
    %187 = vmatprep.subr.mxu0 0.0
    %188 = vmatpush2.msra.mxu0 0.0
    %189 = vmatprep.subr.mxu0 0.0
    %190 = vmatpush2.msra.mxu0 0.0
    %191 = vmatprep.subr.mxu0 0.0
    %192 = vmatpush2.msra.mxu0 0.0
    %193 = vmatprep.mubr.f32.mxu0 0.0
    %194 = vmatmul.mubr.f32.gmra.mxu0 %v52
    %v195 = vpop.f32.mrf.mxu0
    %v196 = vadd.f32 0.0, %v195
    %v197 = vpop.f32.mrf.mxu0
    %198 = vdwg.mxu0
    %v199 = vmax.f32 %v121, %v196
    %s200 = scalar_lea.vmem [#allocation5], 64
    %v201 = vld [vmem:[%s200] sm:$0xff]
    %v202 = vld [vmem:[%s200 + $0x8] sm:$0xff]
    %v203 = vld [vmem:[%s200 + $0x10] sm:$0xff]
    %v204 = vld [vmem:[%s200 + $0x18] sm:$0xff]
    %205 = vmatprep.subr.mxu0 0.0
    %206 = vmatpush1.msra.mxu0 0.0
    %207 = vmatprep.subr.mxu0 0.0
    %208 = vmatpush1.msra.mxu0 0.0
    %209 = vmatprep.subr.mxu0 0.0
    %210 = vmatpush1.msra.mxu0 0.0
    %211 = vmatprep.subr.mxu0 0.0
    %212 = vmatpush1.msra.mxu0 0.0
    %213 = vmatprep.subr.mxu0 0.0
    %214 = vmatpush1.msra.mxu0 0.0
    %215 = vmatprep.subr.mxu0 0.0
    %216 = vmatpush1.msra.mxu0 0.0
    %217 = vmatprep.subr.mxu0 0.0
    %218 = vmatpush1.msra.mxu0 0.0
    %219 = vmatprep.subr.mxu0 0.0
    %220 = vmatpush1.msra.mxu0 0.0
    %221 = vmatprep.subr.mxu0 0.0
    %222 = vmatpush1.msra.mxu0 0.0
    %223 = vmatprep.subr.mxu0 0.0
    %224 = vmatpush1.msra.mxu0 0.0
    %225 = vmatprep.subr.mxu0 0.0
    %226 = vmatpush1.msra.mxu0 0.0
    %227 = vmatprep.subr.mxu0 0.0
    %228 = vmatpush1.msra.mxu0 0.0
    %229 = vmatprep.subr.mxu0 0.0
    %230 = vmatpush1.msra.mxu0 %v204
    %231 = vmatprep.subr.mxu0 0.0
    %232 = vmatpush1.msra.mxu0 %v203
    %233 = vmatprep.subr.mxu0 0.0
    %234 = vmatpush1.msra.mxu0 %v202
    %235 = vmatprep.subr.mxu0 0.0
    %236 = vmatpush1.msra.mxu0 %v201
    %237 = vmatprep.subr.mxu0 0.0
    %238 = vmatpush2.msra.mxu0 0.0
    %239 = vmatprep.subr.mxu0 0.0
    %240 = vmatpush2.msra.mxu0 0.0
    %241 = vmatprep.subr.mxu0 0.0
    %242 = vmatpush2.msra.mxu0 0.0
    %243 = vmatprep.subr.mxu0 0.0
    %244 = vmatpush2.msra.mxu0 0.0
    %245 = vmatprep.subr.mxu0 0.0
    %246 = vmatpush2.msra.mxu0 0.0
    %247 = vmatprep.subr.mxu0 0.0
    %248 = vmatpush2.msra.mxu0 0.0
    %249 = vmatprep.subr.mxu0 0.0
    %250 = vmatpush2.msra.mxu0 0.0
    %251 = vmatprep.subr.mxu0 0.0
    %252 = vmatpush2.msra.mxu0 0.0
    %253 = vmatprep.subr.mxu0 0.0
    %254 = vmatpush2.msra.mxu0 0.0
    %255 = vmatprep.subr.mxu0 0.0
    %256 = vmatpush2.msra.mxu0 0.0
    %257 = vmatprep.subr.mxu0 0.0
    %258 = vmatpush2.msra.mxu0 0.0
    %259 = vmatprep.subr.mxu0 0.0
    %260 = vmatpush2.msra.mxu0 0.0
    %261 = vmatprep.subr.mxu0 0.0
    %262 = vmatpush2.msra.mxu0 0.0
    %263 = vmatprep.subr.mxu0 0.0
    %264 = vmatpush2.msra.mxu0 0.0
    %265 = vmatprep.subr.mxu0 0.0
    %266 = vmatpush2.msra.mxu0 0.0
    %267 = vmatprep.subr.mxu0 0.0
    %268 = vmatpush2.msra.mxu0 0.0
    %269 = vmatprep.mubr.f32.mxu0 0.0
    %270 = vmatmul.mubr.f32.gmra.mxu0 %v52
    %v271 = vpop.f32.mrf.mxu0
    %v272 = vadd.f32 0.0, %v271
    %v273 = vpop.f32.mrf.mxu0
    %274 = vdwg.mxu0
    %v275 = vmax.f32 %v199, %v272
    %276 = vst [vmem:[#allocation7] sm:$0xff] %v275
    // Predicated region
    $region18: #{tpu_custom_call.1} parent=1 // pred_check
      _
    $region19: #{tpu_custom_call.1} parent=1 // pred_check_branch
      %278 = sbr.rel (0) target = $region21
    $region20: #{tpu_custom_call.1} parent=1 // pred_region
      %s280 = ssub.s32 128, 128
      %281 = vsyncadd [#allocation4], %s280
      %s283 = sshll.u32 [#allocation7], 4
      %s284 = int_to_ptr.vmem [resolvable:$true] %s283
      %286 = dma.vmem_to_hbm [thread:$0]  %s284, 128, %s2, [#allocation4]
    $region21: #{tpu_custom_call.1} parent=1 // pred_fallthru
      _
    // Predicated region
    $region22: #{tpu_custom_call.1} parent=1 // pred_check
      _
    $region23: #{tpu_custom_call.1} parent=1 // pred_check_branch
      %288 = sbr.rel (0) target = $region25
    $region24: #{tpu_custom_call.1} parent=1 // pred_region
      %289 = dma.done [#allocation4], 128
    $region25: #{tpu_custom_call.1} parent=1 // pred_fallthru
      _
    %290 = vsyncpa [#allocation3], 1
    %291 = vsyncpa [#allocation6], 1
    %292 = vsyncpa [#allocation4], 1

</llo_original>
